<compile_context>
chip_gen: v7x
topology: tpu7x:2x2x1
jax: 0.10.0
libtpu: 0.0.40
codegen_flags: <defaults>
</compile_context>

<pallas_src>
import math

import jax
import jax.numpy as jnp
from jax.experimental import pallas as pl
from jax.experimental.pallas import tpu as pltpu

DROPOUT_RATE = 0.1  # stand-in for settings.dropout_rate (not defined in the snippet)


def _round_up(x, m):
    return ((x + m - 1) // m) * m


def _make_kernel(p, training):
    inv_keep = 1.0 / (1.0 - p)

    def kernel(*refs):
        if training:
            (x_ref, w1_ref, b1_ref, w2_ref, b2_ref, w3_ref,
             r2_ref, r3_ref, b3_ref, o_ref) = refs
        else:
            (x_ref, w1_ref, b1_ref, w2_ref, b2_ref, w3_ref,
             b3_ref, o_ref) = refs
            r2_ref = r3_ref = None

        # linear1 + relu  (bf16 MXU inputs, f32 accumulation)
        h1 = jnp.dot(x_ref[...], w1_ref[...],
                     preferred_element_type=jnp.float32) + b1_ref[...]
        h1 = jnp.maximum(h1, 0.0)

        # linear2 + relu
        h2 = jnp.dot(h1.astype(jnp.bfloat16), w2_ref[...],
                     preferred_element_type=jnp.float32) + b2_ref[...]
        h2 = jnp.maximum(h2, 0.0)

        if training:
            # dropout(h2): the 1/(1-p) scale is folded into w3 by the wrapper,
            # so this is a pure select (no extra VPU mul).
            h2 = jnp.where(r2_ref[...] >= p, h2, 0.0)

        # linear3 with out_features == 1: VPU multiply + lane (XLU) reduce
        # instead of a wasteful N=1 MXU matmul. b3 is an SMEM scalar.
        v = jnp.sum(h2 * w3_ref[...], axis=-1, keepdims=True) + b3_ref[0]

        if training:
            v = jnp.where(r3_ref[...] >= p, v * jnp.float32(inv_keep), 0.0)

        o_ref[...] = v.astype(o_ref.dtype)

    return kernel


def _dropout_uniforms(key, n_rows, l2):
    """Uniform [0,1) randoms for the two dropout sites (deterministic per key)."""
    k2, k3 = jax.random.split(key)
    r2 = jax.random.uniform(k2, (n_rows, l2), jnp.float32)
    r3 = jax.random.uniform(k3, (n_rows, 1), jnp.float32)
    return r2, r3


def dropout_critic_forward(state, params, *, p=DROPOUT_RATE, training=False,
                           dropout_key=None, block_b=512):
    """state: (B, state_size) f32; params: (w1,b1,w2,b2,w3,b3)."""
    w1, b1, w2, b2, w3, b3 = params
    B, S = state.shape
    L1 = w1.shape[1]
    L2 = w2.shape[1]

    # Batch tile: multiple of 8 sublanes, capped (512 rows is tiny vs VMEM on
    # all of v5e/v6e/v7x, so no vmem_limit_bytes override needed).
    TB = min(block_b, _round_up(B, 8))
    Bp = pl.cdiv(B, TB) * TB
    grid = (Bp // TB,)

    # bf16 MXU inputs; f32 accumulation happens inside the kernel.
    x = state.astype(jnp.bfloat16)
    if Bp != B:
        x = jnp.pad(x, ((0, Bp - B), (0, 0)))
    w1b = w1.astype(jnp.bfloat16)
    w2b = w2.astype(jnp.bfloat16)

    # linear3 weight as a (1, L2) row; fold the h2-dropout scale into it.
    w3_row = w3.reshape(1, L2).astype(jnp.float32)
    if training:
        w3_row = w3_row * jnp.float32(1.0 / (1.0 - p))
    b3_s = b3.reshape(1).astype(jnp.float32)  # SMEM scalar

    def const_spec(shape):
        return pl.BlockSpec(shape, lambda i: (0, 0))

    in_specs = [
        pl.BlockSpec((TB, S), lambda i: (i, 0)),   # state tile
        const_spec((S, L1)),                       # w1 (VMEM-resident)
        const_spec((1, L1)),                       # b1
        const_spec((L1, L2)),                      # w2
        const_spec((1, L2)),                       # b2
        const_spec((1, L2)),                       # w3 row
    ]
    args = [x, w1b, b1, w2b, b2, w3_row]

    if training:
        if dropout_key is None:
            raise ValueError("dropout_key is required when training=True")
        r2, r3 = _dropout_uniforms(dropout_key, Bp, L2)
        in_specs += [pl.BlockSpec((TB, L2), lambda i: (i, 0)),
                     pl.BlockSpec((TB, 1), lambda i: (i, 0))]
        args += [r2, r3]

    in_specs.append(pl.BlockSpec(memory_space=pltpu.MemorySpace.SMEM))  # b3
    args.append(b3_s)

    out = pl.pallas_call(
        _make_kernel(p, training),
        out_shape=jax.ShapeDtypeStruct((Bp, 1), jnp.float32),
        grid=grid,
        in_specs=in_specs,
        out_specs=pl.BlockSpec((TB, 1), lambda i: (i, 0)),
        compiler_params=pltpu.CompilerParams(
            dimension_semantics=("parallel",)),  # megacore sharding on v7x
    )(*args)
    return out[:B]


def init_params(key, state_size, L1, L2):
    """Deterministic init mimicking PyTorch nn.Linear default U(-1/sqrt(in), 1/sqrt(in))."""
    def linear(key, fan_in, fan_out):
        kw, kb = jax.random.split(key)
        bound = 1.0 / math.sqrt(fan_in)
        w = jax.random.uniform(kw, (fan_in, fan_out), jnp.float32, -bound, bound)
        b = jax.random.uniform(kb, (1, fan_out), jnp.float32, -bound, bound)
        return w, b

    k1, k2, k3 = jax.random.split(key, 3)
    w1, b1 = linear(k1, state_size, L1)
    w2, b2 = linear(k2, L1, L2)
    w3, b3 = linear(k3, L2, 1)
    return (w1, b1, w2, b2, w3, b3)


def reference_forward(state, params, *, p=DROPOUT_RATE, training=False,
                      r2=None, r3=None):
    """Pure-JAX reference mirroring the kernel's numerics (bf16 dot inputs)."""
    w1, b1, w2, b2, w3, b3 = params
    xb = state.astype(jnp.bfloat16)
    h1 = jnp.maximum(
        jnp.dot(xb, w1.astype(jnp.bfloat16),
                preferred_element_type=jnp.float32) + b1, 0.0)
    h2 = jnp.maximum(
        jnp.dot(h1.astype(jnp.bfloat16), w2.astype(jnp.bfloat16),
                preferred_element_type=jnp.float32) + b2, 0.0)
    if training:
        h2 = jnp.where(r2 >= p, h2 / (1.0 - p), 0.0)
    v = jnp.sum(h2 * w3.reshape(1, -1), axis=-1, keepdims=True) + b3.reshape(1, 1)
    if training:
        v = jnp.where(r3 >= p, v / (1.0 - p), 0.0)
    return v


if __name__ == "__main__":
    # Small shapes consistent with the module: batch=8, state_size=32, L1=64, L2=32.
    B, STATE, L1, L2 = 8, 32, 64, 32

    key = jax.random.PRNGKey(0)
    k_state, k_params, k_drop = jax.random.split(key, 3)
    state = jax.random.normal(k_state, (B, STATE), jnp.float32)
    params = init_params(k_params, STATE, L1, L2)

    # Eval mode (dropout = identity): check against the reference.
    out_eval = jax.block_until_ready(
        dropout_critic_forward(state, params, training=False))
    ref_eval = reference_forward(state, params, training=False)
    assert out_eval.shape == (B, 1)
    assert jnp.allclose(out_eval, ref_eval, atol=1e-4, rtol=1e-4), (
        jnp.max(jnp.abs(out_eval - ref_eval)))

    # Training mode: masks are reproducible from the key, so we can check exactly.
    out_train = jax.block_until_ready(
        dropout_critic_forward(state, params, training=True, dropout_key=k_drop))
    r2, r3 = _dropout_uniforms(k_drop, B, L2)
    ref_train = reference_forward(state, params, training=True, r2=r2, r3=r3)
    assert out_train.shape == (B, 1)
    assert jnp.allclose(out_train, ref_train, atol=1e-4, rtol=1e-4), (
        jnp.max(jnp.abs(out_train - ref_train)))

    print("KERNEL_OK")
</pallas_src>

<mosaic_0001>
module attributes {stable_mosaic.version = 11 : i64} {
  func.func @kernel(%arg0: i32, %arg1: memref<8x32xbf16, #tpu.memory_space<vmem>>, %arg2: memref<32x64xbf16, #tpu.memory_space<vmem>>, %arg3: memref<1x64xf32, #tpu.memory_space<vmem>>, %arg4: memref<64x32xbf16, #tpu.memory_space<vmem>>, %arg5: memref<1x32xf32, #tpu.memory_space<vmem>>, %arg6: memref<1x32xf32, #tpu.memory_space<vmem>>, %arg7: memref<1xf32, #tpu.memory_space<smem>>, %arg8: memref<8x1xf32, #tpu.memory_space<vmem>>) attributes {dimension_semantics = [#tpu.dimension_semantics<parallel>], iteration_bounds = array<i64: 1>, scalar_prefetch = 0 : i64, scratch_operands = 0 : i64, tpu.core_type = #tpu.core_type<tc>, window_params = [{transform_indices = @transform_0, window_bounds = array<i64: 8, 32>}, {pipeline_mode = #tpu.pipeline_mode<synchronous>, transform_indices = @transform_1, window_bounds = array<i64: 32, 64>}, {pipeline_mode = #tpu.pipeline_mode<synchronous>, transform_indices = @transform_2, window_bounds = array<i64: 1, 64>}, {pipeline_mode = #tpu.pipeline_mode<synchronous>, transform_indices = @transform_3, window_bounds = array<i64: 64, 32>}, {pipeline_mode = #tpu.pipeline_mode<synchronous>, transform_indices = @transform_4, window_bounds = array<i64: 1, 32>}, {pipeline_mode = #tpu.pipeline_mode<synchronous>, transform_indices = @transform_5, window_bounds = array<i64: 1, 32>}, {transform_indices = @transform_6, window_bounds = array<i64: 1>}, {transform_indices = @transform_7, window_bounds = array<i64: 8, 1>}]} {
    %c0 = arith.constant 0 : index
    %c0_0 = arith.constant 0 : index
    %0 = vector.load %arg1[%c0, %c0_0] : memref<8x32xbf16, #tpu.memory_space<vmem>>, vector<8x32xbf16>
    %c0_1 = arith.constant 0 : index
    %c0_2 = arith.constant 0 : index
    %1 = vector.load %arg2[%c0_1, %c0_2] : memref<32x64xbf16, #tpu.memory_space<vmem>>, vector<32x64xbf16>
    %cst = arith.constant dense<0.000000e+00> : vector<8x64xf32>
    %2 = tpu.matmul %0, %1, %cst {dimension_numbers = #tpu.dot_dimension_numbers<[1], [0], [0], [1], [0, 0, 1, 1], [], []>} : vector<8x32xbf16>, vector<32x64xbf16>, vector<8x64xf32> -> vector<8x64xf32>
    %c0_3 = arith.constant 0 : index
    %c0_4 = arith.constant 0 : index
    %3 = vector.load %arg3[%c0_3, %c0_4] : memref<1x64xf32, #tpu.memory_space<vmem>>, vector<1x64xf32>
    %4 = vector.broadcast %3 : vector<1x64xf32> to vector<8x64xf32>
    %5 = arith.addf %2, %4 : vector<8x64xf32>
    %cst_5 = arith.constant 0.000000e+00 : f32
    %6 = vector.broadcast %cst_5 : f32 to vector<8x64xf32>
    %7 = arith.maximumf %5, %6 : vector<8x64xf32>
    %8 = arith.truncf %7 : vector<8x64xf32> to vector<8x64xbf16>
    %c0_6 = arith.constant 0 : index
    %c0_7 = arith.constant 0 : index
    %9 = vector.load %arg4[%c0_6, %c0_7] : memref<64x32xbf16, #tpu.memory_space<vmem>>, vector<64x32xbf16>
    %cst_8 = arith.constant dense<0.000000e+00> : vector<8x32xf32>
    %10 = tpu.matmul %8, %9, %cst_8 {dimension_numbers = #tpu.dot_dimension_numbers<[1], [0], [0], [1], [0, 0, 1, 1], [], []>} : vector<8x64xbf16>, vector<64x32xbf16>, vector<8x32xf32> -> vector<8x32xf32>
    %c0_9 = arith.constant 0 : index
    %c0_10 = arith.constant 0 : index
    %11 = vector.load %arg5[%c0_9, %c0_10] : memref<1x32xf32, #tpu.memory_space<vmem>>, vector<1x32xf32>
    %12 = vector.broadcast %11 : vector<1x32xf32> to vector<8x32xf32>
    %13 = arith.addf %10, %12 : vector<8x32xf32>
    %cst_11 = arith.constant 0.000000e+00 : f32
    %14 = vector.broadcast %cst_11 : f32 to vector<8x32xf32>
    %15 = arith.maximumf %13, %14 : vector<8x32xf32>
    %c0_12 = arith.constant 0 : index
    %c0_13 = arith.constant 0 : index
    %16 = vector.load %arg6[%c0_12, %c0_13] : memref<1x32xf32, #tpu.memory_space<vmem>>, vector<1x32xf32>
    %17 = vector.broadcast %16 : vector<1x32xf32> to vector<8x32xf32>
    %18 = arith.mulf %15, %17 : vector<8x32xf32>
    %cst_14 = arith.constant dense<0.000000e+00> : vector<8xf32>
    %19 = vector.multi_reduction <add>, %18, %cst_14 [1] : vector<8x32xf32> to vector<8xf32>
    %20 = vector.shape_cast %19 : vector<8xf32> to vector<8x1xf32>
    %c0_15 = arith.constant 0 : index
    %21 = memref.load %arg7[%c0_15] : memref<1xf32, #tpu.memory_space<smem>>
    %22 = vector.broadcast %21 : f32 to vector<8x1xf32>
    %23 = arith.addf %20, %22 : vector<8x1xf32>
    %c0_16 = arith.constant 0 : index
    %c0_17 = arith.constant 0 : index
    %24 = vector.load %arg8[%c0_16, %c0_17] : memref<8x1xf32, #tpu.memory_space<vmem>>, vector<8x1xf32>
    tpu.vector_store %arg8[%c0_16, %c0_17], %23 {strides = array<i32>} : memref<8x1xf32, #tpu.memory_space<vmem>>, vector<8x1xf32>,
    return
  }
  func.func @transform_0(%arg0: i32) -> (i32, i32) {
    %c0_i32 = arith.constant 0 : i32
    %c0_i32_0 = arith.constant 0 : i32
    return %arg0, %c0_i32 : i32, i32
  }
  func.func @transform_1(%arg0: i32) -> (i32, i32) {
    %c0_i32 = arith.constant 0 : i32
    %c0_i32_0 = arith.constant 0 : i32
    %c0_i32_1 = arith.constant 0 : i32
    return %c0_i32, %c0_i32_0 : i32, i32
  }
  func.func @transform_2(%arg0: i32) -> (i32, i32) {
    %c0_i32 = arith.constant 0 : i32
    %c0_i32_0 = arith.constant 0 : i32
    %c0_i32_1 = arith.constant 0 : i32
    return %c0_i32, %c0_i32_0 : i32, i32
  }
  func.func @transform_3(%arg0: i32) -> (i32, i32) {
    %c0_i32 = arith.constant 0 : i32
    %c0_i32_0 = arith.constant 0 : i32
    %c0_i32_1 = arith.constant 0 : i32
    return %c0_i32, %c0_i32_0 : i32, i32
  }
  func.func @transform_4(%arg0: i32) -> (i32, i32) {
    %c0_i32 = arith.constant 0 : i32
    %c0_i32_0 = arith.constant 0 : i32
    %c0_i32_1 = arith.constant 0 : i32
    return %c0_i32, %c0_i32_0 : i32, i32
  }
  func.func @transform_5(%arg0: i32) -> (i32, i32) {
    %c0_i32 = arith.constant 0 : i32
    %c0_i32_0 = arith.constant 0 : i32
    %c0_i32_1 = arith.constant 0 : i32
    return %c0_i32, %c0_i32_0 : i32, i32
  }
  func.func @transform_6(%arg0: i32) -> i32 {
    %c0_i32 = arith.constant 0 : i32
    %c0_i32_0 = arith.constant 0 : i32
    return %c0_i32 : i32
  }
  func.func @transform_7(%arg0: i32) -> (i32, i32) {
    %c0_i32 = arith.constant 0 : i32
    %c0_i32_0 = arith.constant 0 : i32
    return %arg0, %c0_i32 : i32, i32
  }
}

</mosaic_0001>

<llo_original>
// kernel: tpu_custom_call.1
$region0: #{tpu_custom_call.1}
  #allocation0 [shape = 'u32[]', space=smem, size = 0x4, offset = 0x4, fixed_abs, tag = 'smem constant byte address 0x4 - core index']
  #allocation1 [shape = 'u32[144,128]{1,0:T(1,128)}', space=vmem, size = 0x12000, scoped, tag = 'internal scratch']
  #allocation2 [shape = 'f32[1]{0:T(128)S(6)}', space=smem, size = 0x200, scoped, tag = 'scoped memory for tpu_custom_call.1']
  %s0 = inlined_call_operand.vmem [shape: bf16[8,32], index: 0, kind: input, shape index: {}]
  %s1 = inlined_call_operand.vmem [shape: bf16[32,64], index: 1, kind: input, shape index: {}]
  %s2 = inlined_call_operand.vmem [shape: f32[1,64], index: 2, kind: input, shape index: {}]
  %s3 = inlined_call_operand.vmem [shape: bf16[64,32], index: 3, kind: input, shape index: {}]
  %s4 = inlined_call_operand.vmem [shape: f32[1,32], index: 4, kind: input, shape index: {}]
  %s5 = inlined_call_operand.vmem [shape: f32[1,32], index: 5, kind: input, shape index: {}]
  %s6 = inlined_call_operand.<no memory space> [shape: f32[1], index: 6, kind: input, shape index: {}]
  %s7 = inlined_call_operand.vmem [shape: f32[8,1], index: 7, kind: output, shape index: {}]
  %s8 = sld [smem:[#allocation0]]
  $region38: #{tpu_custom_call.1} parent=0
    _
  %s10 = ssub.s32 1, %s8
  %s11 = scalar_select 0, %s10, %s8
  %12 = sst [smem:[#allocation2]] %s6
  // Predicated region
  $region2: #{tpu_custom_call.1} parent=0 // pred_check
    _
  $region3: #{tpu_custom_call.1} parent=0 // pred_check_branch
    %14 = sbr.rel (0) target = $region5
  $region4: #{tpu_custom_call.1} parent=0 // pred_region
    _
  $region5: #{tpu_custom_call.1} parent=0 // pred_fallthru
    _
  // Predicated region
  $region6: #{tpu_custom_call.1} parent=0 // pred_check
    _
  $region7: #{tpu_custom_call.1} parent=0 // pred_check_branch
    %16 = sbr.rel (0) target = $region9
  $region8: #{tpu_custom_call.1} parent=0 // pred_region
    _
  $region9: #{tpu_custom_call.1} parent=0 // pred_fallthru
    _
  // Predicated region
  $region10: #{tpu_custom_call.1} parent=0 // pred_check
    _
  $region11: #{tpu_custom_call.1} parent=0 // pred_check_branch
    %18 = sbr.rel (0) target = $region13
  $region12: #{tpu_custom_call.1} parent=0 // pred_region
    _
  $region13: #{tpu_custom_call.1} parent=0 // pred_fallthru
    _
  // Predicated region
  $region14: #{tpu_custom_call.1} parent=0 // pred_check
    _
  $region15: #{tpu_custom_call.1} parent=0 // pred_check_branch
    %20 = sbr.rel (0) target = $region17
  $region16: #{tpu_custom_call.1} parent=0 // pred_region
    _
  $region17: #{tpu_custom_call.1} parent=0 // pred_fallthru
    _
  // Predicated region
  $region18: #{tpu_custom_call.1} parent=0 // pred_check
    _
  $region19: #{tpu_custom_call.1} parent=0 // pred_check_branch
    %22 = sbr.rel (0) target = $region21
  $region20: #{tpu_custom_call.1} parent=0 // pred_region
    _
  $region21: #{tpu_custom_call.1} parent=0 // pred_fallthru
    _
  // Predicated region
  $region22: #{tpu_custom_call.1} parent=0 // pred_check
    _
  $region23: #{tpu_custom_call.1} parent=0 // pred_check_branch
    %24 = sbr.rel (0) target = $region25
  $region24: #{tpu_custom_call.1} parent=0 // pred_region
    _
  $region25: #{tpu_custom_call.1} parent=0 // pred_fallthru
    _
  // Predicated region
  $region26: #{tpu_custom_call.1} parent=0 // pred_check
    _
  $region27: #{tpu_custom_call.1} parent=0 // pred_check_branch
    %26 = sbr.rel (0) target = $region29
  $region28: #{tpu_custom_call.1} parent=0 // pred_region
    _
  $region29: #{tpu_custom_call.1} parent=0 // pred_fallthru
    _
  %v28 = vld [vmem:[%s0] sm:$0xf]
  %v29 = vld [vmem:[%s1] sm:$0xf]
  %v30 = vld [vmem:[%s1 + $0x4] sm:$0xf]
  %v31 = vld [vmem:[%s1 + $0x8] sm:$0xf]
  %v32 = vld [vmem:[%s1 + $0xc] sm:$0xf]
  %v33 = vld [vmem:[%s2] sm:$0x1]
  %v35 = vlaneseq
  %v36 = vshrl.u32 %v35, 7
  %v37 = vsub.s32 0, %v36
  %v38 = vrot.slane %v33, %v37
  %v44 = vunpack.c.l.b16 %v29
  %v45 = vunpack.c.l.b16 %v30
  %v46 = vunpack.c.l.b16 %v31
  %v47 = vunpack.c.l.b16 %v32
  %v48 = vpack.c.b16 %v45, %v44
  %v49 = vpack.c.b16 %v47, %v46
  %vm52 = vcmask 261120
  %v54 = vsel %vm52, %v28, 0
  %56 = vmatprep.subr.bf16.mxu0 0
  %57 = vmatpush1.bf16.msra.mxu0 %v48
  %58 = vmatprep.subr.bf16.mxu0 0
  %59 = vmatpush1.bf16.msra.mxu0 %v49
  %60 = vmatprep.subr.bf16.mxu0 0
  %61 = vmatpush1.bf16.msra.mxu0 0
  %62 = vmatprep.subr.bf16.mxu0 0
  %63 = vmatpush1.bf16.msra.mxu0 0
  %64 = vmatprep.subr.bf16.mxu0 0
  %65 = vmatpush1.bf16.msra.mxu0 0
  %66 = vmatprep.subr.bf16.mxu0 0
  %67 = vmatpush1.bf16.msra.mxu0 0
  %68 = vmatprep.subr.bf16.mxu0 0
  %69 = vmatpush1.bf16.msra.mxu0 0
  %70 = vmatprep.subr.bf16.mxu0 0
  %71 = vmatpush1.bf16.msra.mxu0 0
  %72 = vmatprep.subr.bf16.mxu0 0
  %73 = vmatpush1.bf16.msra.mxu0 0
  %74 = vmatprep.subr.bf16.mxu0 0
  %75 = vmatpush1.bf16.msra.mxu0 0
  %76 = vmatprep.subr.bf16.mxu0 0
  %77 = vmatpush1.bf16.msra.mxu0 0
  %78 = vmatprep.subr.bf16.mxu0 0
  %79 = vmatpush1.bf16.msra.mxu0 0
  %80 = vmatprep.subr.bf16.mxu0 0
  %81 = vmatpush1.bf16.msra.mxu0 0
  %82 = vmatprep.subr.bf16.mxu0 0
  %83 = vmatpush1.bf16.msra.mxu0 0
  %84 = vmatprep.subr.bf16.mxu0 0
  %85 = vmatpush1.bf16.msra.mxu0 0
  %86 = vmatprep.subr.bf16.mxu0 0
  %87 = vmatpush1.bf16.msra.mxu0 0
  %88 = vmatprep.mubr.bf16.mxu0 0
  %89 = vmatmul.mubr.bf16.gmra.mrb[0].mxu0 %v54
  %v90 = vpop.f32.mrb[0].mxu0
  %v91 = vadd.f32 %v38, %v90
  %v92 = vpop.f32.mrb[0].mxu0
  %v93 = vpop.f32.mrb[0].mxu0
  %v94 = vpop.f32.mrb[0].mxu0
  %95 = vdwg.mxu0
  %v96 = vmax.f32 %v91, 0.0
  %v97 = vpack.c.bf16 %v96, %v96
  %v98 = vld [vmem:[%s3] sm:$0xf]
  %v99 = vld [vmem:[%s3 + $0x4] sm:$0xf]
  %v100 = vld [vmem:[%s3 + $0x8] sm:$0xf]
  %v101 = vld [vmem:[%s3 + $0xc] sm:$0xf]
  %v102 = vld [vmem:[%s3 + $0x10] sm:$0xf]
  %v103 = vld [vmem:[%s3 + $0x14] sm:$0xf]
  %v104 = vld [vmem:[%s3 + $0x18] sm:$0xf]
  %v105 = vld [vmem:[%s3 + $0x1c] sm:$0xf]
  %v106 = vld [vmem:[%s4] sm:$0x1]
  %v108 = vlaneseq
  %v109 = vshrl.u32 %v108, 7
  %v110 = vsub.s32 0, %v109
  %v111 = vrot.slane %v106, %v110
  %v121 = vunpack.c.l.b16 %v98
  %v122 = vunpack.c.l.b16 %v99
  %v123 = vunpack.c.l.b16 %v100
  %v124 = vunpack.c.l.b16 %v101
  %v125 = vunpack.c.l.b16 %v102
  %v126 = vunpack.c.l.b16 %v103
  %v127 = vunpack.c.l.b16 %v104
  %v128 = vunpack.c.l.b16 %v105
  %v129 = vpack.c.b16 %v122, %v121
  %v130 = vpack.c.b16 %v124, %v123
  %v131 = vpack.c.b16 %v126, %v125
  %v132 = vpack.c.b16 %v128, %v127
  %vm137 = vcmask 523264
  %v139 = vsel %vm137, %v97, 0
  %141 = vmatprep.subr.bf16.mxu0 0
  %142 = vmatpush1.bf16.msra.mxu0 %v129
  %143 = vmatprep.subr.bf16.mxu0 0
  %144 = vmatpush1.bf16.msra.mxu0 %v130
  %145 = vmatprep.subr.bf16.mxu0 0
  %146 = vmatpush1.bf16.msra.mxu0 %v131
  %147 = vmatprep.subr.bf16.mxu0 0
  %148 = vmatpush1.bf16.msra.mxu0 %v132
  %149 = vmatprep.subr.bf16.mxu0 0
  %150 = vmatpush1.bf16.msra.mxu0 0
  %151 = vmatprep.subr.bf16.mxu0 0
  %152 = vmatpush1.bf16.msra.mxu0 0
  %153 = vmatprep.subr.bf16.mxu0 0
  %154 = vmatpush1.bf16.msra.mxu0 0
  %155 = vmatprep.subr.bf16.mxu0 0
  %156 = vmatpush1.bf16.msra.mxu0 0
  %157 = vmatprep.subr.bf16.mxu0 0
  %158 = vmatpush1.bf16.msra.mxu0 0
  %159 = vmatprep.subr.bf16.mxu0 0
  %160 = vmatpush1.bf16.msra.mxu0 0
  %161 = vmatprep.subr.bf16.mxu0 0
  %162 = vmatpush1.bf16.msra.mxu0 0
  %163 = vmatprep.subr.bf16.mxu0 0
  %164 = vmatpush1.bf16.msra.mxu0 0
  %165 = vmatprep.subr.bf16.mxu0 0
  %166 = vmatpush1.bf16.msra.mxu0 0
  %167 = vmatprep.subr.bf16.mxu0 0
  %168 = vmatpush1.bf16.msra.mxu0 0
  %169 = vmatprep.subr.bf16.mxu0 0
  %170 = vmatpush1.bf16.msra.mxu0 0
  %171 = vmatprep.subr.bf16.mxu0 0
  %172 = vmatpush1.bf16.msra.mxu0 0
  %173 = vmatprep.mubr.bf16.mxu0 0
  %174 = vmatmul.mubr.bf16.gmra.mrb[0].mxu0 %v139
  %v175 = vpop.f32.mrb[0].mxu0
  %v176 = vadd.f32 %v111, %v175
  %v177 = vpop.f32.mrb[0].mxu0
  %v178 = vpop.f32.mrb[0].mxu0
  %v179 = vpop.f32.mrb[0].mxu0
  %180 = vdwg.mxu0
  %v181 = vmax.f32 %v176, 0.0
  %v182 = vld [vmem:[%s5] sm:$0x1]
  %v184 = vlaneseq
  %v185 = vshrl.u32 %v184, 7
  %v186 = vsub.s32 0, %v185
  %v187 = vrot.slane %v182, %v186
  %v189 = vmul.f32 %v181, %v187
  %v190 = vsel %vm52, %v189, 0.0
  %191 = vadd.xlane.f32.xlu0 %v190
  %v192 = vpop.xlane.xlu0 %191
  %s193 = sld [smem:[#allocation2]]
  %v194 = vstv %s193
  %v195 = vadd.f32 %v192, %v194
  %vm196 = vcmask 7168
  %197 = vst.msk [vmem:[%s7] sm:$0xff] %vm196, %v195
  // Predicated region
  $region30: #{tpu_custom_call.1} parent=0 // pred_check
    _
  $region31: #{tpu_custom_call.1} parent=0 // pred_check_branch
    %199 = sbr.rel (0) target = $region33
  $region32: #{tpu_custom_call.1} parent=0 // pred_region
    _
  $region33: #{tpu_custom_call.1} parent=0 // pred_fallthru
    _
  // Predicated region
  $region34: #{tpu_custom_call.1} parent=0 // pred_check
    _
  $region35: #{tpu_custom_call.1} parent=0 // pred_check_branch
    %201 = sbr.rel (0) target = $region37
  $region36: #{tpu_custom_call.1} parent=0 // pred_region
    _
  $region37: #{tpu_custom_call.1} parent=0 // pred_fallthru
    _

</llo_original>
